<compile_context>
chip_gen: v5e
topology: v5e:2x2
jax: 0.10.0
libtpu: 0.0.40
codegen_flags: <defaults>
</compile_context>

<pallas_src>
import jax
import jax.numpy as jnp
from jax.experimental import pallas as pl
from jax.experimental.pallas import tpu as pltpu

LANE = 128
SUBLANE = 8


def _round_up(x, m):
    return ((x + m - 1) // m) * m


def finetune_kernel(x_ref, w_ref, b_ref, o_ref):
    # x_ref: (TB, S*D) f32           w_ref: (S*D, OUTp) f32 (lane-padded, resident)
    # b_ref: (1, OUTp) f32           o_ref: (TB, OUT)   f32 (true width -> small HBM write)
    acc = jnp.dot(x_ref[...], w_ref[...], preferred_element_type=jnp.float32)
    acc = acc + b_ref[...]                      # full lane width (OUTp)
    o_ref[...] = acc[:, : o_ref.shape[-1]]      # store only the true OUT columns
    # TODO(synk): the generic FineTuneWrapper accepts an arbitrary (possibly non-linear)
    # backbone; the algebraic collapse in the wrapper is only valid for affine backbones.


def finetune_forward(x, wb, bb, wr, br, *, block_b=None, x_buffer_bytes=8 << 20):
    """y = linear_regressor(mean_{dim=1}(backbone(x))),  x: (B, S, D_IN) -> (B, OUT)."""
    B, S, D = x.shape
    OUT = wr.shape[1]
    f32 = jnp.float32

    # ---- fold mean (1/S), backbone and regressor into one (S*D, OUT) weight --------
    w_fold = jnp.dot(wb.astype(f32), wr.astype(f32), precision="highest") * (1.0 / S)  # (D, OUT)
    w_big = jnp.tile(w_fold, (S, 1))                                                   # (S*D, OUT)
    b_big = (jnp.dot(bb.reshape(1, -1).astype(f32), wr.astype(f32), precision="highest")
             + br.reshape(1, -1).astype(f32))                                          # (1, OUT)

    # lane-pad only the tiny VMEM-resident weight/bias so the MXU GEMM is lane-dense;
    # the HBM output itself stays at its true width OUT (no 32x write inflation).
    OUTp = _round_up(OUT, LANE)
    w_pad = jnp.zeros((S * D, OUTp), f32).at[:, :OUT].set(w_big)
    b_pad = jnp.zeros((1, OUTp), f32).at[:, :OUT].set(b_big)

    # ---- x: stream straight from HBM (no cast / pad / copy passes over x) ----------
    x2 = x.reshape(B, S * D)                    # contiguous dim-merge: free
    Bp = B
    if B < SUBLANE:                             # trivial pad only for tiny batches
        Bp = SUBLANE
        x2 = jnp.pad(x2, ((0, Bp - B), (0, 0)))

    # ---- batch tile sized by bytes (~8 MiB per x buffer), not by a row cap ---------
    row_bytes = S * D * x2.dtype.itemsize
    if block_b is None:
        block_b = max(SUBLANE, ((x_buffer_bytes // row_bytes) // SUBLANE) * SUBLANE)
    if block_b >= Bp:
        block_b = Bp                            # single tile (full-dim block)
    else:
        block_b = max(SUBLANE, (block_b // SUBLANE) * SUBLANE)
    grid = (pl.cdiv(Bp, block_b),)              # boundary tile handled by Pallas masking

    x_block_bytes = block_b * row_bytes
    out_block_bytes = block_b * OUT * 4
    acc_bytes = block_b * OUTp * 4              # in-kernel f32 accumulator
    weight_bytes = (S * D * OUTp + OUTp) * 4
    vmem_limit = int(
        min(max(2 * (x_block_bytes + out_block_bytes) + 2 * weight_bytes
                + acc_bytes + (4 << 20),
                16 << 20),
            48 << 20)
    )

    out = pl.pallas_call(
        finetune_kernel,
        out_shape=jax.ShapeDtypeStruct((Bp, OUT), f32),
        grid_spec=pltpu.PrefetchScalarGridSpec(
            num_scalar_prefetch=0,
            grid=grid,
            in_specs=[
                pl.BlockSpec((block_b, S * D), lambda i: (i, 0)),   # x tile (streamed)
                pl.BlockSpec((S * D, OUTp), lambda i: (0, 0)),      # folded weight (resident)
                pl.BlockSpec((1, OUTp), lambda i: (0, 0)),          # folded bias (resident)
            ],
            out_specs=pl.BlockSpec((block_b, OUT), lambda i: (i, 0)),
        ),
        compiler_params=pltpu.CompilerParams(
            # batch tiles are independent; on multi-TC parts this lets them shard.
            dimension_semantics=("parallel",),
            vmem_limit_bytes=vmem_limit,
        ),
    )(x2, w_pad, b_pad)

    return out if Bp == B else out[:B]


if __name__ == "__main__":
    B, S, D_IN, HIDDEN, OUT = 2, 8, 32, 32, 4

    key = jax.random.PRNGKey(0)
    k_x, k_wb, k_bb, k_wr, k_br = jax.random.split(key, 5)

    x = jax.random.normal(k_x, (B, S, D_IN), dtype=jnp.float32)

    # Deterministic parameter init (uniform, roughly matching nn.Linear's scale).
    wb = jax.random.uniform(k_wb, (D_IN, HIDDEN), jnp.float32,
                            minval=-1.0, maxval=1.0) / jnp.sqrt(D_IN)
    bb = jax.random.uniform(k_bb, (HIDDEN,), jnp.float32,
                            minval=-1.0, maxval=1.0) / jnp.sqrt(D_IN)
    wr = jax.random.uniform(k_wr, (HIDDEN, OUT), jnp.float32,
                            minval=-1.0, maxval=1.0) / jnp.sqrt(HIDDEN)
    br = jax.random.uniform(k_br, (OUT,), jnp.float32,
                            minval=-1.0, maxval=1.0) / jnp.sqrt(HIDDEN)

    out = jax.block_until_ready(finetune_forward(x, wb, bb, wr, br))

    # Pure-JAX f32 reference with exactly the PyTorch forward semantics:
    # per-token backbone -> mean over dim=1 -> linear regressor (no bf16 quantization).
    h = jnp.einsum("bsd,dh->bsh", x, wb, precision="highest") + bb
    ref = jnp.dot(jnp.mean(h, axis=1), wr, precision="highest") + br

    assert out.shape == (B, OUT), out.shape
    assert jnp.allclose(out, ref, atol=2e-3, rtol=2e-3), (out, ref)
    print("KERNEL_OK")
</pallas_src>

<mosaic_0001>
module attributes {stable_mosaic.version = 11 : i64} {
  func.func @finetune_kernel(%arg0: i32, %arg1: memref<8x256xf32, #tpu.memory_space<vmem>>, %arg2: memref<256x128xf32, #tpu.memory_space<vmem>>, %arg3: memref<1x128xf32, #tpu.memory_space<vmem>>, %arg4: memref<8x4xf32, #tpu.memory_space<vmem>>) attributes {dimension_semantics = [#tpu.dimension_semantics<parallel>], iteration_bounds = array<i64: 1>, scalar_prefetch = 0 : i64, scratch_operands = 0 : i64, tpu.core_type = #tpu.core_type<tc>, window_params = [{transform_indices = @transform_0, window_bounds = array<i64: 8, 256>}, {pipeline_mode = #tpu.pipeline_mode<synchronous>, transform_indices = @transform_1, window_bounds = array<i64: 256, 128>}, {pipeline_mode = #tpu.pipeline_mode<synchronous>, transform_indices = @transform_2, window_bounds = array<i64: 1, 128>}, {transform_indices = @transform_3, window_bounds = array<i64: 8, 4>}]} {
    %c0 = arith.constant 0 : index
    %c0_0 = arith.constant 0 : index
    %0 = vector.load %arg1[%c0, %c0_0] : memref<8x256xf32, #tpu.memory_space<vmem>>, vector<8x256xf32>
    %c0_1 = arith.constant 0 : index
    %c0_2 = arith.constant 0 : index
    %1 = vector.load %arg2[%c0_1, %c0_2] : memref<256x128xf32, #tpu.memory_space<vmem>>, vector<256x128xf32>
    %cst = arith.constant dense<0.000000e+00> : vector<8x128xf32>
    %2 = tpu.matmul %0, %1, %cst {dimension_numbers = #tpu.dot_dimension_numbers<[1], [0], [0], [1], [0, 0, 1, 1], [], []>} : vector<8x256xf32>, vector<256x128xf32>, vector<8x128xf32> -> vector<8x128xf32>
    %c0_3 = arith.constant 0 : index
    %c0_4 = arith.constant 0 : index
    %3 = vector.load %arg3[%c0_3, %c0_4] : memref<1x128xf32, #tpu.memory_space<vmem>>, vector<1x128xf32>
    %4 = vector.broadcast %3 : vector<1x128xf32> to vector<8x128xf32>
    %5 = arith.addf %2, %4 : vector<8x128xf32>
    %6 = vector.extract_strided_slice %5 {offsets = [0, 0], sizes = [8, 4], strides = [1, 1]} : vector<8x128xf32> to vector<8x4xf32>
    %c0_5 = arith.constant 0 : index
    %c0_6 = arith.constant 0 : index
    %7 = vector.load %arg4[%c0_5, %c0_6] : memref<8x4xf32, #tpu.memory_space<vmem>>, vector<8x4xf32>
    tpu.vector_store %arg4[%c0_5, %c0_6], %6 {strides = array<i32>} : memref<8x4xf32, #tpu.memory_space<vmem>>, vector<8x4xf32>,
    return
  }
  func.func @transform_0(%arg0: i32) -> (i32, i32) {
    %c0_i32 = arith.constant 0 : i32
    %c0_i32_0 = arith.constant 0 : i32
    return %arg0, %c0_i32 : i32, i32
  }
  func.func @transform_1(%arg0: i32) -> (i32, i32) {
    %c0_i32 = arith.constant 0 : i32
    %c0_i32_0 = arith.constant 0 : i32
    %c0_i32_1 = arith.constant 0 : i32
    return %c0_i32, %c0_i32_0 : i32, i32
  }
  func.func @transform_2(%arg0: i32) -> (i32, i32) {
    %c0_i32 = arith.constant 0 : i32
    %c0_i32_0 = arith.constant 0 : i32
    %c0_i32_1 = arith.constant 0 : i32
    return %c0_i32, %c0_i32_0 : i32, i32
  }
  func.func @transform_3(%arg0: i32) -> (i32, i32) {
    %c0_i32 = arith.constant 0 : i32
    %c0_i32_0 = arith.constant 0 : i32
    return %arg0, %c0_i32 : i32, i32
  }
}

</mosaic_0001>

<llo_original>
// kernel: tpu_custom_call.1
$region0: #{tpu_custom_call.1}
  #allocation0 [shape = 'u32[]', space=smem, size = 0x4, offset = 0x4, fixed_abs, tag = 'smem constant byte address 0x4 - core index']
  #allocation1 [shape = 'u32[72,128]{1,0:T(1,128)}', space=vmem, size = 0x9000, scoped, tag = 'internal scratch']
  %s0 = inlined_call_operand.hbm [shape: f32[8,256], index: 0, kind: input, shape index: {}]
  %s1 = inlined_call_operand.hbm [shape: f32[256,128], index: 1, kind: input, shape index: {}]
  %s2 = inlined_call_operand.vmem [shape: f32[1,128], index: 2, kind: input, shape index: {}]
  %s3 = inlined_call_operand.vmem [shape: f32[8,4], index: 3, kind: output, shape index: {}]
  %s4 = sld [smem:[#allocation0]]
  $region30: #{tpu_custom_call.1} parent=0
    _
  %s6 = ssub.s32 1, %s4
  %s7 = scalar_select 0, %s6, %s4
  $region1: #{tpu_custom_call.1} parent=0
    #allocation2 [shape = 'u8[8192]{0}', space=vmem, size = 0x2000, scoped, tag = 'input window, operand 0, single buffered']
    #allocation3 [shape = 's32[1]{0}', space=sflag, size = 0x4, scoped, tag = 'scoped memory for tpu_custom_call.1']
    #allocation4 [shape = 'u8[131072]{0}', space=vmem, size = 0x20000, scoped, tag = 'input window, operand 1, single buffered']
    #allocation5 [shape = 's32[1]{0}', space=sflag, size = 0x4, scoped, tag = 'scoped memory for tpu_custom_call.1']
    %8 = vsyncpa [#allocation3], 0
    %9 = vsyncpa [#allocation5], 0
    // Predicated region
    $region2: #{tpu_custom_call.1} parent=1 // pred_check
      _
    $region3: #{tpu_custom_call.1} parent=1 // pred_check_branch
      %11 = sbr.rel (0) target = $region5
    $region4: #{tpu_custom_call.1} parent=1 // pred_region
      %13 = vsyncadd [#allocation3], 0
      %s15 = sshll.u32 %s0, 4
      %s16 = int_to_ptr.hbm [resolvable:$true] %s15
      %s17 = sshll.u32 [#allocation2], 4
      %s18 = int_to_ptr.vmem [resolvable:$true] %s17
      %20 = dma.hbm_to_vmem [thread:$0]  %s16, 256, %s18, [#allocation3]
    $region5: #{tpu_custom_call.1} parent=1 // pred_fallthru
      _
    // Predicated region
    $region6: #{tpu_custom_call.1} parent=1 // pred_check
      _
    $region7: #{tpu_custom_call.1} parent=1 // pred_check_branch
      %22 = sbr.rel (0) target = $region9
    $region8: #{tpu_custom_call.1} parent=1 // pred_region
      %24 = vsyncadd [#allocation5], 0
      %s25 = sshll.u32 %s1, 4
      %s26 = int_to_ptr.hbm [resolvable:$true] %s25
      %s27 = sshll.u32 [#allocation4], 4
      %s28 = int_to_ptr.vmem [resolvable:$true] %s27
      %33 = dma.hbm_to_vmem [thread:$0]  %s26, 4096, %s28, [#allocation5], 128, 128, 8
    $region9: #{tpu_custom_call.1} parent=1 // pred_fallthru
      _
    // Predicated region
    $region10: #{tpu_custom_call.1} parent=1 // pred_check
      _
    $region11: #{tpu_custom_call.1} parent=1 // pred_check_branch
      %35 = sbr.rel (0) target = $region13
    $region12: #{tpu_custom_call.1} parent=1 // pred_region
      _
    $region13: #{tpu_custom_call.1} parent=1 // pred_fallthru
      _
    // Predicated region
    $region14: #{tpu_custom_call.1} parent=1 // pred_check
      _
    $region15: #{tpu_custom_call.1} parent=1 // pred_check_branch
      %37 = sbr.rel (0) target = $region17
    $region16: #{tpu_custom_call.1} parent=1 // pred_region
      %39 = dma.done [#allocation3], 256
    $region17: #{tpu_custom_call.1} parent=1 // pred_fallthru
      _
    // Predicated region
    $region18: #{tpu_custom_call.1} parent=1 // pred_check
      _
    $region19: #{tpu_custom_call.1} parent=1 // pred_check_branch
      %41 = sbr.rel (0) target = $region21
    $region20: #{tpu_custom_call.1} parent=1 // pred_region
      %43 = dma.done [#allocation5], 4096
    $region21: #{tpu_custom_call.1} parent=1 // pred_fallthru
      _
    %v44 = vld [vmem:[#allocation2] sm:$0xff]
    %v45 = vld [vmem:[#allocation2 + $0x8] sm:$0xff]
    %v46 = vld [vmem:[#allocation4] sm:$0xff]
    %v47 = vld [vmem:[#allocation4 + $0x8] sm:$0xff]
    %v48 = vld [vmem:[#allocation4 + $0x10] sm:$0xff]
    %v49 = vld [vmem:[#allocation4 + $0x18] sm:$0xff]
    %v50 = vld [vmem:[#allocation4 + $0x20] sm:$0xff]
    %v51 = vld [vmem:[#allocation4 + $0x28] sm:$0xff]
    %v52 = vld [vmem:[#allocation4 + $0x30] sm:$0xff]
    %v53 = vld [vmem:[#allocation4 + $0x38] sm:$0xff]
    %v54 = vld [vmem:[#allocation4 + $0x40] sm:$0xff]
    %v55 = vld [vmem:[#allocation4 + $0x48] sm:$0xff]
    %v56 = vld [vmem:[#allocation4 + $0x50] sm:$0xff]
    %v57 = vld [vmem:[#allocation4 + $0x58] sm:$0xff]
    %v58 = vld [vmem:[#allocation4 + $0x60] sm:$0xff]
    %v59 = vld [vmem:[#allocation4 + $0x68] sm:$0xff]
    %v60 = vld [vmem:[#allocation4 + $0x70] sm:$0xff]
    %v61 = vld [vmem:[#allocation4 + $0x78] sm:$0xff]
    %v62 = vld [vmem:[#allocation4 + $0x80] sm:$0xff]
    %v63 = vld [vmem:[#allocation4 + $0x88] sm:$0xff]
    %v64 = vld [vmem:[#allocation4 + $0x90] sm:$0xff]
    %v65 = vld [vmem:[#allocation4 + $0x98] sm:$0xff]
    %v66 = vld [vmem:[#allocation4 + $0xa0] sm:$0xff]
    %v67 = vld [vmem:[#allocation4 + $0xa8] sm:$0xff]
    %v68 = vld [vmem:[#allocation4 + $0xb0] sm:$0xff]
    %v69 = vld [vmem:[#allocation4 + $0xb8] sm:$0xff]
    %v70 = vld [vmem:[#allocation4 + $0xc0] sm:$0xff]
    %v71 = vld [vmem:[#allocation4 + $0xc8] sm:$0xff]
    %v72 = vld [vmem:[#allocation4 + $0xd0] sm:$0xff]
    %v73 = vld [vmem:[#allocation4 + $0xd8] sm:$0xff]
    %v74 = vld [vmem:[#allocation4 + $0xe0] sm:$0xff]
    %v75 = vld [vmem:[#allocation4 + $0xe8] sm:$0xff]
    %v76 = vld [vmem:[#allocation4 + $0xf0] sm:$0xff]
    %v77 = vld [vmem:[#allocation4 + $0xf8] sm:$0xff]
    %v78 = vld [vmem:[%s2] sm:$0x1]
    %v80 = vperm.slane %v78, 0
    %82 = vmatpush.msra.mxu0 %v61
    %83 = vmatpush.msra.mxu0 %v60
    %84 = vmatpush.msra.mxu0 %v59
    %85 = vmatpush.msra.mxu0 %v58
    %86 = vmatpush.msra.mxu0 %v57
    %87 = vmatpush.msra.mxu0 %v56
    %88 = vmatpush.msra.mxu0 %v55
    %89 = vmatpush.msra.mxu0 %v54
    %90 = vmatpush.msra.mxu0 %v53
    %91 = vmatpush.msra.mxu0 %v52
    %92 = vmatpush.msra.mxu0 %v51
    %93 = vmatpush.msra.mxu0 %v50
    %94 = vmatpush.msra.mxu0 %v49
    %95 = vmatpush.msra.mxu0 %v48
    %96 = vmatpush.msra.mxu0 %v47
    %97 = vmatpush.msra.mxu0 %v46
    %98 = vmatmul.f32.gmra.mxu0 %v44
    %v99 = vpop.f32.mrf.mxu0
    %v100 = vadd.f32 %v80, %v99
    %101 = vdwg.mxu0
    %102 = vmatpush.msra.mxu0 %v77
    %103 = vmatpush.msra.mxu0 %v76
    %104 = vmatpush.msra.mxu0 %v75
    %105 = vmatpush.msra.mxu0 %v74
    %106 = vmatpush.msra.mxu0 %v73
    %107 = vmatpush.msra.mxu0 %v72
    %108 = vmatpush.msra.mxu0 %v71
    %109 = vmatpush.msra.mxu0 %v70
    %110 = vmatpush.msra.mxu0 %v69
    %111 = vmatpush.msra.mxu0 %v68
    %112 = vmatpush.msra.mxu0 %v67
    %113 = vmatpush.msra.mxu0 %v66
    %114 = vmatpush.msra.mxu0 %v65
    %115 = vmatpush.msra.mxu0 %v64
    %116 = vmatpush.msra.mxu0 %v63
    %117 = vmatpush.msra.mxu0 %v62
    %118 = vmatmul.f32.gmra.mxu0 %v45
    %v119 = vpop.f32.mrf.mxu0
    %v120 = vadd.f32 %v100, %v119
    %121 = vdwg.mxu0
    %vm122 = vcmask 31744
    %123 = vst.msk [vmem:[%s3] sm:$0xff] %vm122, %v120
    // Predicated region
    $region22: #{tpu_custom_call.1} parent=1 // pred_check
      _
    $region23: #{tpu_custom_call.1} parent=1 // pred_check_branch
      %125 = sbr.rel (0) target = $region25
    $region24: #{tpu_custom_call.1} parent=1 // pred_region
      _
    $region25: #{tpu_custom_call.1} parent=1 // pred_fallthru
      _
    // Predicated region
    $region26: #{tpu_custom_call.1} parent=1 // pred_check
      _
    $region27: #{tpu_custom_call.1} parent=1 // pred_check_branch
      %127 = sbr.rel (0) target = $region29
    $region28: #{tpu_custom_call.1} parent=1 // pred_region
      _
    $region29: #{tpu_custom_call.1} parent=1 // pred_fallthru
      _
    %128 = vsyncpa [#allocation3], 1
    %129 = vsyncpa [#allocation5], 1

</llo_original>
